<compile_context>
chip_gen: v5e
topology: v5e:2x2
jax: 0.10.0
libtpu: 0.0.40
codegen_flags: <defaults>
</compile_context>

<pallas_src>
import functools

import jax
import jax.numpy as jnp
from jax import lax
from jax.experimental import pallas as pl
from jax.experimental.pallas import tpu as pltpu


def crf_kernel(feats_ref, logits_row_ref, w_ref, out_ref, *, iteration):
    # feats_ref:      (B, N, D) node features
    # logits_row_ref: (B, 1, N) unary logits, lane-dense row layout
    #                 (pure bitcast of the caller's (B,N,1))
    # w_ref:          (N, N)    raw pairwise weights (symmetrized in-kernel)
    # out_ref:        (B, N, 1) refined logits, caller layout
    feats = feats_ref[...]
    unary_row = logits_row_ref[...]                     # (B,1,N)
    w = w_ref[...]                                      # (N,N)
    n = w.shape[0]

    # In-kernel identity: (a) transposes W on the MXU with the same dot_general
    # pattern as the Gram matmul, (b) masked-reduce flip of the unary logits.
    row_ids = lax.broadcasted_iota(jnp.int32, (n, n), 0)
    col_ids = lax.broadcasted_iota(jnp.int32, (n, n), 1)
    eye = (row_ids == col_ids).astype(jnp.float32)      # (N,N)

    # W symmetrization (was a separate XLA dispatch in the wrapper before):
    # w_t[i,j] = sum_k eye[i,k] * w[j,k] = w[j,i]
    w_t = lax.dot_general(eye, w, (((1,), (1,)), ((), ())),
                          preferred_element_type=jnp.float32)
    w_sym = (w + w_t) * 0.5

    # Cosine similarity, normalize-first (rsqrt on EUP; no (N,N) divide).
    # Note: zero-norm feature rows NaN here exactly as the reference does (0/0).
    inv_norm = lax.rsqrt(jnp.sum(feats * feats, axis=2, keepdims=True))  # (B,N,1)
    feats_n = feats * inv_norm
    sim = jnp.einsum("bid,bjd->bij", feats_n, feats_n,
                     preferred_element_type=jnp.float32)                 # (B,N,N)
    pp = sim * w_sym            # symmetric pairwise potential, (B,N,N)

    # One-time flip of unary logits to column layout (masked reduce, no transpose op).
    unary_col = jnp.sum(eye * unary_row, axis=2, keepdims=True)          # (B,N,1)

    # Mean-field step:  logits <- unary + PP @ (2*sigmoid(logits) - 1)
    # 2*sigmoid(x)-1 == tanh(x/2).  PP is symmetric per batch, so a
    # row-producing step followed by a column-producing step are each exact
    # reference iterations; alternating keeps the fully-unrolled loop
    # transpose-free and off the MXU (VPU multiply + XLU reduce + EUP tanh).
    def pair(_, logits_col):
        coef_col = jnp.tanh(0.5 * logits_col)                     # (B,N,1)
        e_row = jnp.sum(pp * coef_col, axis=1, keepdims=True)     # (B,1,N)
        logits_row = unary_row + e_row
        coef_row = jnp.tanh(0.5 * logits_row)                     # (B,1,N)
        e_col = jnp.sum(pp * coef_row, axis=2, keepdims=True)     # (B,N,1)
        return unary_col + e_col

    logits_col = lax.fori_loop(0, iteration // 2, pair, unary_col, unroll=True)

    if iteration % 2 == 1:  # static leftover step (not hit for iteration=10)
        coef_col = jnp.tanh(0.5 * logits_col)
        e_row = jnp.sum(pp * coef_col, axis=1, keepdims=True)
        logits_row = unary_row + e_row
        logits_col = jnp.sum(eye * logits_row, axis=2, keepdims=True)

    out_ref[...] = logits_col.astype(out_ref.dtype)


def crf_forward(feats, logits, W, iteration=10):
    B, N, D = feats.shape
    assert logits.shape == (B, N, 1)
    assert W.shape == (1, N, N)

    # Wrapper does only free (bitcast) reshapes — no transposes, no compute:
    # (B,N,1)->(B,1,N) and (1,N,N)->(N,N) preserve row-major order exactly.
    logits_row = logits.reshape(B, 1, N)
    w2d = W.reshape(N, N)

    kernel = functools.partial(crf_kernel, iteration=iteration)
    return pl.pallas_call(
        kernel,
        out_shape=jax.ShapeDtypeStruct((B, N, 1), logits.dtype),
        grid=(1,),   # single step: the whole (tiny) batched problem sits in VMEM
        in_specs=[
            pl.BlockSpec((B, N, D), lambda i: (0, 0, 0)),   # feats, batched
            pl.BlockSpec((B, 1, N), lambda i: (0, 0, 0)),   # unary logits (row layout)
            pl.BlockSpec((N, N), lambda i: (0, 0)),         # W (raw; symmetrized in-kernel)
        ],
        out_specs=pl.BlockSpec((B, N, 1), lambda i: (0, 0, 0)),
        # TODO(synk): for production-scale N, tile PP into row panels (MXU
        # matvec per panel, second transposed pass instead of the symmetric
        # row/col trick), single-buffer the shared W block (pl.Buffered(1)),
        # and set vmem_limit_bytes explicitly (64 MiB physical VMEM on v7x).
    )(feats, logits_row, w2d)


def crf_reference(feats, logits, W, iteration=10):
    # Pure-JAX reference mirroring the PyTorch forward exactly.
    feats_norm = jnp.linalg.norm(feats, axis=2, keepdims=True)          # (B,N,1)
    pairwise_norm = jnp.einsum("bik,bjk->bij", feats_norm, feats_norm)  # (B,N,N)
    pairwise_dot = jnp.einsum("bid,bjd->bij", feats, feats)             # (B,N,N)
    pairwise_sim = pairwise_dot / pairwise_norm
    W_sym = (W + jnp.transpose(W, (0, 2, 1))) / 2
    pairwise_potential = pairwise_sim * W_sym
    unary = logits
    for _ in range(iteration):
        probs = jnp.transpose(jax.nn.sigmoid(logits), (0, 2, 1))        # (B,1,N)
        E = jnp.sum(probs * pairwise_potential
                    - (1 - probs) * pairwise_potential, axis=2, keepdims=True)
        logits = unary + E
    return logits


if __name__ == "__main__":
    B, N, D = 2, 16, 32        # num_nodes = 16
    ITERATION = 10

    key = jax.random.PRNGKey(0)
    k_f, k_l, k_w = jax.random.split(key, 3)
    feats = jax.random.normal(k_f, (B, N, D), dtype=jnp.float32)
    logits = jax.random.normal(k_l, (B, N, 1), dtype=jnp.float32)
    # nn.Parameter(torch.zeros(1, N, N)) is a trivial no-op; use small random
    # values so the mean-field iteration actually does work.
    W = 0.1 * jax.random.normal(k_w, (1, N, N), dtype=jnp.float32)

    out = crf_forward(feats, logits, W, iteration=ITERATION)
    out = jax.block_until_ready(out)

    ref = crf_reference(feats, logits, W, iteration=ITERATION)
    assert out.shape == (B, N, 1)
    assert jnp.allclose(out, ref, rtol=1e-4, atol=1e-5), "mismatch vs reference"

    print("KERNEL_OK")
</pallas_src>

<mosaic_0001>
module attributes {stable_mosaic.version = 11 : i64} {
  func.func @crf_kernel(%arg0: i32, %arg1: memref<2x16x32xf32, #tpu.memory_space<vmem>>, %arg2: memref<2x1x16xf32, #tpu.memory_space<vmem>>, %arg3: memref<16x16xf32, #tpu.memory_space<vmem>>, %arg4: memref<2x16x1xf32, #tpu.memory_space<vmem>>) attributes {dimension_semantics = [#tpu.dimension_semantics<arbitrary>], iteration_bounds = array<i64: 1>, scalar_prefetch = 0 : i64, scratch_operands = 0 : i64, tpu.core_type = #tpu.core_type<tc>, window_params = [{pipeline_mode = #tpu.pipeline_mode<synchronous>, transform_indices = @transform_0, window_bounds = array<i64: 2, 16, 32>}, {pipeline_mode = #tpu.pipeline_mode<synchronous>, transform_indices = @transform_1, window_bounds = array<i64: 2, 1, 16>}, {pipeline_mode = #tpu.pipeline_mode<synchronous>, transform_indices = @transform_2, window_bounds = array<i64: 16, 16>}, {pipeline_mode = #tpu.pipeline_mode<synchronous>, transform_indices = @transform_3, window_bounds = array<i64: 2, 16, 1>}]} {
    %c0 = arith.constant 0 : index
    %c0_0 = arith.constant 0 : index
    %c0_1 = arith.constant 0 : index
    %0 = vector.load %arg1[%c0, %c0_0, %c0_1] : memref<2x16x32xf32, #tpu.memory_space<vmem>>, vector<2x16x32xf32>
    %c0_2 = arith.constant 0 : index
    %c0_3 = arith.constant 0 : index
    %c0_4 = arith.constant 0 : index
    %1 = vector.load %arg2[%c0_2, %c0_3, %c0_4] : memref<2x1x16xf32, #tpu.memory_space<vmem>>, vector<2x1x16xf32>
    %c0_5 = arith.constant 0 : index
    %c0_6 = arith.constant 0 : index
    %2 = vector.load %arg3[%c0_5, %c0_6] : memref<16x16xf32, #tpu.memory_space<vmem>>, vector<16x16xf32>
    %3 = tpu.iota {dimensions = array<i32: 0>} : vector<16x16xi32>
    %4 = tpu.iota {dimensions = array<i32: 1>} : vector<16x16xi32>
    %5 = arith.cmpi eq, %3, %4 : vector<16x16xi32>
    %6 = arith.extui %5 : vector<16x16xi1> to vector<16x16xi32>
    %7 = arith.sitofp %6 : vector<16x16xi32> to vector<16x16xf32>
    %cst = arith.constant dense<0.000000e+00> : vector<16x16xf32>
    %8 = tpu.matmul %7, %2, %cst {dimension_numbers = #tpu.dot_dimension_numbers<[1], [1], [0], [0], [0, 0, 1, 0], [], []>} : vector<16x16xf32>, vector<16x16xf32>, vector<16x16xf32> -> vector<16x16xf32>
    %9 = arith.addf %2, %8 : vector<16x16xf32>
    %cst_7 = arith.constant 5.000000e-01 : f32
    %10 = vector.broadcast %cst_7 : f32 to vector<16x16xf32>
    %11 = arith.mulf %9, %10 : vector<16x16xf32>
    %12 = arith.mulf %0, %0 : vector<2x16x32xf32>
    %cst_8 = arith.constant dense<0.000000e+00> : vector<2x16xf32>
    %13 = vector.multi_reduction <add>, %12, %cst_8 [2] : vector<2x16x32xf32> to vector<2x16xf32>
    %14 = vector.shape_cast %13 : vector<2x16xf32> to vector<2x16x1xf32>
    %15 = math.rsqrt %14 : vector<2x16x1xf32>
    %16 = vector.broadcast %15 : vector<2x16x1xf32> to vector<2x16x32xf32>
    %17 = arith.mulf %0, %16 : vector<2x16x32xf32>
    "tpu.trace_start"() <{level = 10 : i32, message = "bid,bjd->bij"}> : () -> ()
    %cst_9 = arith.constant dense<0.000000e+00> : vector<2x16x16xf32>
    %18 = tpu.matmul %17, %17, %cst_9 {dimension_numbers = #tpu.dot_dimension_numbers<[2], [2], [1], [1], [0, 0, 0, 1, 1, 1], [0], [0]>} : vector<2x16x32xf32>, vector<2x16x32xf32>, vector<2x16x16xf32> -> vector<2x16x16xf32>
    "tpu.trace_stop"() : () -> ()
    %19 = vector.shape_cast %11 : vector<16x16xf32> to vector<1x16x16xf32>
    %20 = vector.broadcast %19 : vector<1x16x16xf32> to vector<2x16x16xf32>
    %21 = arith.mulf %18, %20 : vector<2x16x16xf32>
    %22 = vector.shape_cast %7 : vector<16x16xf32> to vector<1x16x16xf32>
    %23 = vector.broadcast %22 : vector<1x16x16xf32> to vector<2x16x16xf32>
    %24 = vector.broadcast %1 : vector<2x1x16xf32> to vector<2x16x16xf32>
    %25 = arith.mulf %23, %24 : vector<2x16x16xf32>
    %cst_10 = arith.constant dense<0.000000e+00> : vector<2x16xf32>
    %26 = vector.multi_reduction <add>, %25, %cst_10 [2] : vector<2x16x16xf32> to vector<2x16xf32>
    %27 = vector.shape_cast %26 : vector<2x16xf32> to vector<2x16x1xf32>
    %c0_i32 = arith.constant 0 : i32
    %cst_11 = arith.constant 5.000000e-01 : f32
    %28 = vector.broadcast %cst_11 : f32 to vector<2x16x1xf32>
    %29 = arith.mulf %28, %27 : vector<2x16x1xf32>
    %30 = math.tanh %29 : vector<2x16x1xf32>
    %31 = vector.broadcast %30 : vector<2x16x1xf32> to vector<2x16x16xf32>
    %32 = arith.mulf %21, %31 : vector<2x16x16xf32>
    %cst_12 = arith.constant dense<0.000000e+00> : vector<2x16xf32>
    %33 = vector.multi_reduction <add>, %32, %cst_12 [1] : vector<2x16x16xf32> to vector<2x16xf32>
    %34 = vector.shape_cast %33 : vector<2x16xf32> to vector<2x1x16xf32>
    %35 = arith.addf %1, %34 : vector<2x1x16xf32>
    %cst_13 = arith.constant 5.000000e-01 : f32
    %36 = vector.broadcast %cst_13 : f32 to vector<2x1x16xf32>
    %37 = arith.mulf %36, %35 : vector<2x1x16xf32>
    %38 = math.tanh %37 : vector<2x1x16xf32>
    %39 = vector.broadcast %38 : vector<2x1x16xf32> to vector<2x16x16xf32>
    %40 = arith.mulf %21, %39 : vector<2x16x16xf32>
    %cst_14 = arith.constant dense<0.000000e+00> : vector<2x16xf32>
    %41 = vector.multi_reduction <add>, %40, %cst_14 [2] : vector<2x16x16xf32> to vector<2x16xf32>
    %42 = vector.shape_cast %41 : vector<2x16xf32> to vector<2x16x1xf32>
    %43 = arith.addf %27, %42 : vector<2x16x1xf32>
    %c1_i32 = arith.constant 1 : i32
    %cst_15 = arith.constant 5.000000e-01 : f32
    %44 = vector.broadcast %cst_15 : f32 to vector<2x16x1xf32>
    %45 = arith.mulf %44, %43 : vector<2x16x1xf32>
    %46 = math.tanh %45 : vector<2x16x1xf32>
    %47 = vector.broadcast %46 : vector<2x16x1xf32> to vector<2x16x16xf32>
    %48 = arith.mulf %21, %47 : vector<2x16x16xf32>
    %cst_16 = arith.constant dense<0.000000e+00> : vector<2x16xf32>
    %49 = vector.multi_reduction <add>, %48, %cst_16 [1] : vector<2x16x16xf32> to vector<2x16xf32>
    %50 = vector.shape_cast %49 : vector<2x16xf32> to vector<2x1x16xf32>
    %51 = arith.addf %1, %50 : vector<2x1x16xf32>
    %cst_17 = arith.constant 5.000000e-01 : f32
    %52 = vector.broadcast %cst_17 : f32 to vector<2x1x16xf32>
    %53 = arith.mulf %52, %51 : vector<2x1x16xf32>
    %54 = math.tanh %53 : vector<2x1x16xf32>
    %55 = vector.broadcast %54 : vector<2x1x16xf32> to vector<2x16x16xf32>
    %56 = arith.mulf %21, %55 : vector<2x16x16xf32>
    %cst_18 = arith.constant dense<0.000000e+00> : vector<2x16xf32>
    %57 = vector.multi_reduction <add>, %56, %cst_18 [2] : vector<2x16x16xf32> to vector<2x16xf32>
    %58 = vector.shape_cast %57 : vector<2x16xf32> to vector<2x16x1xf32>
    %59 = arith.addf %27, %58 : vector<2x16x1xf32>
    %c2_i32 = arith.constant 2 : i32
    %cst_19 = arith.constant 5.000000e-01 : f32
    %60 = vector.broadcast %cst_19 : f32 to vector<2x16x1xf32>
    %61 = arith.mulf %60, %59 : vector<2x16x1xf32>
    %62 = math.tanh %61 : vector<2x16x1xf32>
    %63 = vector.broadcast %62 : vector<2x16x1xf32> to vector<2x16x16xf32>
    %64 = arith.mulf %21, %63 : vector<2x16x16xf32>
    %cst_20 = arith.constant dense<0.000000e+00> : vector<2x16xf32>
    %65 = vector.multi_reduction <add>, %64, %cst_20 [1] : vector<2x16x16xf32> to vector<2x16xf32>
    %66 = vector.shape_cast %65 : vector<2x16xf32> to vector<2x1x16xf32>
    %67 = arith.addf %1, %66 : vector<2x1x16xf32>
    %cst_21 = arith.constant 5.000000e-01 : f32
    %68 = vector.broadcast %cst_21 : f32 to vector<2x1x16xf32>
    %69 = arith.mulf %68, %67 : vector<2x1x16xf32>
    %70 = math.tanh %69 : vector<2x1x16xf32>
    %71 = vector.broadcast %70 : vector<2x1x16xf32> to vector<2x16x16xf32>
    %72 = arith.mulf %21, %71 : vector<2x16x16xf32>
    %cst_22 = arith.constant dense<0.000000e+00> : vector<2x16xf32>
    %73 = vector.multi_reduction <add>, %72, %cst_22 [2] : vector<2x16x16xf32> to vector<2x16xf32>
    %74 = vector.shape_cast %73 : vector<2x16xf32> to vector<2x16x1xf32>
    %75 = arith.addf %27, %74 : vector<2x16x1xf32>
    %c3_i32 = arith.constant 3 : i32
    %cst_23 = arith.constant 5.000000e-01 : f32
    %76 = vector.broadcast %cst_23 : f32 to vector<2x16x1xf32>
    %77 = arith.mulf %76, %75 : vector<2x16x1xf32>
    %78 = math.tanh %77 : vector<2x16x1xf32>
    %79 = vector.broadcast %78 : vector<2x16x1xf32> to vector<2x16x16xf32>
    %80 = arith.mulf %21, %79 : vector<2x16x16xf32>
    %cst_24 = arith.constant dense<0.000000e+00> : vector<2x16xf32>
    %81 = vector.multi_reduction <add>, %80, %cst_24 [1] : vector<2x16x16xf32> to vector<2x16xf32>
    %82 = vector.shape_cast %81 : vector<2x16xf32> to vector<2x1x16xf32>
    %83 = arith.addf %1, %82 : vector<2x1x16xf32>
    %cst_25 = arith.constant 5.000000e-01 : f32
    %84 = vector.broadcast %cst_25 : f32 to vector<2x1x16xf32>
    %85 = arith.mulf %84, %83 : vector<2x1x16xf32>
    %86 = math.tanh %85 : vector<2x1x16xf32>
    %87 = vector.broadcast %86 : vector<2x1x16xf32> to vector<2x16x16xf32>
    %88 = arith.mulf %21, %87 : vector<2x16x16xf32>
    %cst_26 = arith.constant dense<0.000000e+00> : vector<2x16xf32>
    %89 = vector.multi_reduction <add>, %88, %cst_26 [2] : vector<2x16x16xf32> to vector<2x16xf32>
    %90 = vector.shape_cast %89 : vector<2x16xf32> to vector<2x16x1xf32>
    %91 = arith.addf %27, %90 : vector<2x16x1xf32>
    %c4_i32 = arith.constant 4 : i32
    %cst_27 = arith.constant 5.000000e-01 : f32
    %92 = vector.broadcast %cst_27 : f32 to vector<2x16x1xf32>
    %93 = arith.mulf %92, %91 : vector<2x16x1xf32>
    %94 = math.tanh %93 : vector<2x16x1xf32>
    %95 = vector.broadcast %94 : vector<2x16x1xf32> to vector<2x16x16xf32>
    %96 = arith.mulf %21, %95 : vector<2x16x16xf32>
    %cst_28 = arith.constant dense<0.000000e+00> : vector<2x16xf32>
    %97 = vector.multi_reduction <add>, %96, %cst_28 [1] : vector<2x16x16xf32> to vector<2x16xf32>
    %98 = vector.shape_cast %97 : vector<2x16xf32> to vector<2x1x16xf32>
    %99 = arith.addf %1, %98 : vector<2x1x16xf32>
    %cst_29 = arith.constant 5.000000e-01 : f32
    %100 = vector.broadcast %cst_29 : f32 to vector<2x1x16xf32>
    %101 = arith.mulf %100, %99 : vector<2x1x16xf32>
    %102 = math.tanh %101 : vector<2x1x16xf32>
    %103 = vector.broadcast %102 : vector<2x1x16xf32> to vector<2x16x16xf32>
    %104 = arith.mulf %21, %103 : vector<2x16x16xf32>
    %cst_30 = arith.constant dense<0.000000e+00> : vector<2x16xf32>
    %105 = vector.multi_reduction <add>, %104, %cst_30 [2] : vector<2x16x16xf32> to vector<2x16xf32>
    %106 = vector.shape_cast %105 : vector<2x16xf32> to vector<2x16x1xf32>
    %107 = arith.addf %27, %106 : vector<2x16x1xf32>
    %c0_31 = arith.constant 0 : index
    %c0_32 = arith.constant 0 : index
    %c0_33 = arith.constant 0 : index
    %108 = vector.load %arg4[%c0_31, %c0_32, %c0_33] : memref<2x16x1xf32, #tpu.memory_space<vmem>>, vector<2x16x1xf32>
    tpu.vector_store %arg4[%c0_31, %c0_32, %c0_33], %107 {strides = array<i32>} : memref<2x16x1xf32, #tpu.memory_space<vmem>>, vector<2x16x1xf32>,
    return
  }
  func.func @transform_0(%arg0: i32) -> (i32, i32, i32) {
    %c0_i32 = arith.constant 0 : i32
    %c0_i32_0 = arith.constant 0 : i32
    %c0_i32_1 = arith.constant 0 : i32
    %c0_i32_2 = arith.constant 0 : i32
    return %c0_i32, %c0_i32_0, %c0_i32_1 : i32, i32, i32
  }
  func.func @transform_1(%arg0: i32) -> (i32, i32, i32) {
    %c0_i32 = arith.constant 0 : i32
    %c0_i32_0 = arith.constant 0 : i32
    %c0_i32_1 = arith.constant 0 : i32
    %c0_i32_2 = arith.constant 0 : i32
    return %c0_i32, %c0_i32_0, %c0_i32_1 : i32, i32, i32
  }
  func.func @transform_2(%arg0: i32) -> (i32, i32) {
    %c0_i32 = arith.constant 0 : i32
    %c0_i32_0 = arith.constant 0 : i32
    %c0_i32_1 = arith.constant 0 : i32
    return %c0_i32, %c0_i32_0 : i32, i32
  }
  func.func @transform_3(%arg0: i32) -> (i32, i32, i32) {
    %c0_i32 = arith.constant 0 : i32
    %c0_i32_0 = arith.constant 0 : i32
    %c0_i32_1 = arith.constant 0 : i32
    %c0_i32_2 = arith.constant 0 : i32
    return %c0_i32, %c0_i32_0, %c0_i32_1 : i32, i32, i32
  }
}

</mosaic_0001>

<llo_original>
// kernel: tpu_custom_call.1
$region0: #{tpu_custom_call.1}
  #allocation0 [shape = 'u32[]', space=smem, size = 0x4, offset = 0x4, fixed_abs, tag = 'smem constant byte address 0x4 - core index']
  #allocation1 [shape = 'u32[72,128]{1,0:T(1,128)}', space=vmem, size = 0x9000, scoped, tag = 'internal scratch']
  %s0 = inlined_call_operand.hbm [shape: f32[2,16,32], index: 0, kind: input, shape index: {}]
  %s1 = inlined_call_operand.hbm [shape: f32[2,1,16], index: 1, kind: input, shape index: {}]
  %s2 = inlined_call_operand.hbm [shape: f32[16,16], index: 2, kind: input, shape index: {}]
  %s3 = inlined_call_operand.vmem [shape: f32[2,16,1], index: 3, kind: output, shape index: {}]
  %s4 = sld [smem:[#allocation0]]
  $region34: #{tpu_custom_call.1} parent=0
    _
  %s6 = ssub.s32 1, %s4
  %s7 = scalar_select 0, %s6, %s4
  $region1: #{tpu_custom_call.1} parent=0
    #allocation2 [shape = 'u8[16384]{0}', space=vmem, size = 0x4000, scoped, tag = 'input window, operand 0, single buffered']
    #allocation3 [shape = 's32[1]{0}', space=sflag, size = 0x4, scoped, tag = 'scoped memory for tpu_custom_call.1']
    #allocation4 [shape = 'u8[1024]{0}', space=vmem, size = 0x400, scoped, tag = 'input window, operand 1, single buffered']
    #allocation5 [shape = 's32[1]{0}', space=sflag, size = 0x4, scoped, tag = 'scoped memory for tpu_custom_call.1']
    #allocation6 [shape = 'u8[8192]{0}', space=vmem, size = 0x2000, scoped, tag = 'input window, operand 2, single buffered']
    %8 = vsyncpa [#allocation3], 0
    %9 = vsyncpa [#allocation5], 0
    // Predicated region
    $region2: #{tpu_custom_call.1} parent=1 // pred_check
      _
    $region3: #{tpu_custom_call.1} parent=1 // pred_check_branch
      %11 = sbr.rel (0) target = $region5
    $region4: #{tpu_custom_call.1} parent=1 // pred_region
      %13 = vsyncadd [#allocation3], 0
      %s14 = sshll.u32 %s0, 4
      %s15 = int_to_ptr.hbm [resolvable:$true] %s14
      %s16 = sshll.u32 [#allocation2], 4
      %s17 = int_to_ptr.vmem [resolvable:$true] %s16
      %22 = dma.hbm_to_vmem [thread:$0]  %s15, 512, %s17, [#allocation3], 128, 128, 8
    $region5: #{tpu_custom_call.1} parent=1 // pred_fallthru
      _
    // Predicated region
    $region6: #{tpu_custom_call.1} parent=1 // pred_check
      _
    $region7: #{tpu_custom_call.1} parent=1 // pred_check_branch
      %24 = sbr.rel (0) target = $region9
    $region8: #{tpu_custom_call.1} parent=1 // pred_region
      %26 = vsyncadd [#allocation5], 0
      %s27 = sshll.u32 %s1, 4
      %s28 = int_to_ptr.hbm [resolvable:$true] %s27
      %s29 = sshll.u32 [#allocation4], 4
      %s30 = int_to_ptr.vmem [resolvable:$true] %s29
      %35 = dma.hbm_to_vmem [thread:$0]  %s28, 32, %s30, [#allocation5], 16, 16, 1
    $region9: #{tpu_custom_call.1} parent=1 // pred_fallthru
      _
    // Predicated region
    $region10: #{tpu_custom_call.1} parent=1 // pred_check
      _
    $region11: #{tpu_custom_call.1} parent=1 // pred_check_branch
      %37 = sbr.rel (0) target = $region13
    $region12: #{tpu_custom_call.1} parent=1 // pred_region
      %39 = vsyncadd [#allocation5], 0
      %s40 = sshll.u32 %s2, 4
      %s41 = int_to_ptr.hbm [resolvable:$true] %s40
      %s42 = sshll.u32 [#allocation6], 4
      %s43 = int_to_ptr.vmem [resolvable:$true] %s42
      %48 = dma.hbm_to_vmem [thread:$0]  %s41, 256, %s43, [#allocation5], 128, 128, 8
    $region13: #{tpu_custom_call.1} parent=1 // pred_fallthru
      _
    // Predicated region
    $region14: #{tpu_custom_call.1} parent=1 // pred_check
      _
    $region15: #{tpu_custom_call.1} parent=1 // pred_check_branch
      %50 = sbr.rel (0) target = $region17
    $region16: #{tpu_custom_call.1} parent=1 // pred_region
      %52 = dma.done [#allocation3], 512
    $region17: #{tpu_custom_call.1} parent=1 // pred_fallthru
      _
    // Predicated region
    $region18: #{tpu_custom_call.1} parent=1 // pred_check
      _
    $region19: #{tpu_custom_call.1} parent=1 // pred_check_branch
      %54 = sbr.rel (0) target = $region21
    $region20: #{tpu_custom_call.1} parent=1 // pred_region
      %56 = dma.done [#allocation5], 32
    $region21: #{tpu_custom_call.1} parent=1 // pred_fallthru
      _
    // Predicated region
    $region22: #{tpu_custom_call.1} parent=1 // pred_check
      _
    $region23: #{tpu_custom_call.1} parent=1 // pred_check_branch
      %58 = sbr.rel (0) target = $region25
    $region24: #{tpu_custom_call.1} parent=1 // pred_region
      %60 = dma.done [#allocation5], 256
    $region25: #{tpu_custom_call.1} parent=1 // pred_fallthru
      _
    %v61 = vld [vmem:[#allocation2] sm:$0xff]
    %v62 = vld [vmem:[#allocation2 + $0x8] sm:$0xff]
    %v63 = vld [vmem:[#allocation2 + $0x10] sm:$0xff]
    %v64 = vld [vmem:[#allocation2 + $0x18] sm:$0xff]
    %v65 = vld [vmem:[#allocation4] sm:$0x1]
    %v66 = vld [vmem:[#allocation4 + $0x1] sm:$0x1]
    %v67 = vld [vmem:[#allocation6] sm:$0xff]
    %v68 = vld [vmem:[#allocation6 + $0x8] sm:$0xff]
    %v69 = vlaneseq
    %v70 = vshrl.u32 %v69, 7
    %v71 = vadd.s32 %v70, 8
    %v72 = vlaneseq
    %v73 = vand.u32 %v72, 127
    %vm74 = vcmp.eq.s32.totalorder %v70, %v73
    %vm75 = vcmp.eq.s32.totalorder %v71, %v73
    %v76 = vsel %vm74, 1, 0
    %v77 = vsel %vm75, 1, 0
    %v78 = vcvt.s32.f32 %v76
    %v79 = vcvt.s32.f32 %v77
    %vm80 = vcmask 130048
    %v82 = vsel %vm80, %v78, 0
    %v85 = vsel %vm80, %v79, 0
    %v88 = vsel %vm80, %v67, 0
    %v91 = vsel %vm80, %v68, 0
    %93 = vmatpush.xpose.msra.mxu0 0.0
    %94 = vmatpush.xpose.msra.mxu0 0.0
    %95 = vmatpush.xpose.msra.mxu0 0.0
    %96 = vmatpush.xpose.msra.mxu0 0.0
    %97 = vmatpush.xpose.msra.mxu0 0.0
    %98 = vmatpush.xpose.msra.mxu0 0.0
    %99 = vmatpush.xpose.msra.mxu0 0.0
    %100 = vmatpush.xpose.msra.mxu0 0.0
    %101 = vmatpush.xpose.msra.mxu0 0.0
    %102 = vmatpush.xpose.msra.mxu0 0.0
    %103 = vmatpush.xpose.msra.mxu0 0.0
    %104 = vmatpush.xpose.msra.mxu0 0.0
    %105 = vmatpush.xpose.msra.mxu0 0.0
    %106 = vmatpush.xpose.msra.mxu0 0.0
    %107 = vmatpush.xpose.msra.mxu0 %v91
    %108 = vmatpush.xpose.msra.mxu0 %v88
    %109 = vmatmul.f32.gmra.mxu0 %v82
    %v110 = vpop.f32.mrf.mxu0
    %v111 = vadd.f32 0.0, %v110
    %112 = vmatmul.f32.gmra.mxu0 %v85
    %v113 = vpop.f32.mrf.mxu0
    %v114 = vadd.f32 0.0, %v113
    %115 = vdwg.mxu0
    %v116 = vadd.f32 %v67, %v111
    %v117 = vadd.f32 %v68, %v114
    %v118 = vmul.f32 %v116, 0.5
    %v119 = vmul.f32 %v117, 0.5
    %v120 = vmul.f32 %v61, %v61
    %v121 = vmul.f32 %v62, %v62
    %v122 = vmul.f32 %v63, %v63
    %v123 = vmul.f32 %v64, %v64
    %vm124 = vcmask 261120
    %v125 = vsel %vm124, %v120, 0.0
    %126 = vadd.xlane.f32.xlu0 %v125
    %v127 = vpop.xlane.xlu0 %126
    %v128 = vsel %vm124, %v121, 0.0
    %129 = vadd.xlane.f32.xlu0 %v128
    %v130 = vpop.xlane.xlu0 %129
    %v131 = vsel %vm124, %v122, 0.0
    %132 = vadd.xlane.f32.xlu0 %v131
    %v133 = vpop.xlane.xlu0 %132
    %v134 = vsel %vm124, %v123, 0.0
    %135 = vadd.xlane.f32.xlu0 %v134
    %v136 = vpop.xlane.xlu0 %135
    %v137 = vrsqrt.pop %v127
    %v138 = vmul.f32 %v137, %v127
    %v139 = vmul.f32 %v138, %v137
    %v140 = vmul.f32 0.5, %v139
    %v141 = vsub.f32 1.5, %v140
    %v142 = vmul.f32 %v137, %v141
    %vm143 = vweird.f32 %v127
    %vm144 = vweird.f32 %v137
    %vm145 = vmor %vm143, %vm144
    %v146 = vsel %vm145, %v137, %v142
    %v147 = vrsqrt.pop %v130
    %v148 = vmul.f32 %v147, %v130
    %v149 = vmul.f32 %v148, %v147
    %v150 = vmul.f32 0.5, %v149
    %v151 = vsub.f32 1.5, %v150
    %v152 = vmul.f32 %v147, %v151
    %vm153 = vweird.f32 %v130
    %vm154 = vweird.f32 %v147
    %vm155 = vmor %vm153, %vm154
    %v156 = vsel %vm155, %v147, %v152
    %v157 = vrsqrt.pop %v133
    %v158 = vmul.f32 %v157, %v133
    %v159 = vmul.f32 %v158, %v157
    %v160 = vmul.f32 0.5, %v159
    %v161 = vsub.f32 1.5, %v160
    %v162 = vmul.f32 %v157, %v161
    %vm163 = vweird.f32 %v133
    %vm164 = vweird.f32 %v157
    %vm165 = vmor %vm163, %vm164
    %v166 = vsel %vm165, %v157, %v162
    %v167 = vrsqrt.pop %v136
    %v168 = vmul.f32 %v167, %v136
    %v169 = vmul.f32 %v168, %v167
    %v170 = vmul.f32 0.5, %v169
    %v171 = vsub.f32 1.5, %v170
    %v172 = vmul.f32 %v167, %v171
    %vm173 = vweird.f32 %v136
    %vm174 = vweird.f32 %v167
    %vm175 = vmor %vm173, %vm174
    %v176 = vsel %vm175, %v167, %v172
    %v177 = vmul.f32 %v61, %v146
    %v178 = vmul.f32 %v62, %v156
    %v179 = vmul.f32 %v63, %v166
    %v180 = vmul.f32 %v64, %v176
    %v182 = vsel %vm124, %v177, 0
    %v185 = vsel %vm124, %v178, 0
    %187 = vmatpush.xpose.msra.mxu0 0.0
    %188 = vmatpush.xpose.msra.mxu0 0.0
    %189 = vmatpush.xpose.msra.mxu0 0.0
    %190 = vmatpush.xpose.msra.mxu0 0.0
    %191 = vmatpush.xpose.msra.mxu0 0.0
    %192 = vmatpush.xpose.msra.mxu0 0.0
    %193 = vmatpush.xpose.msra.mxu0 0.0
    %194 = vmatpush.xpose.msra.mxu0 0.0
    %195 = vmatpush.xpose.msra.mxu0 0.0
    %196 = vmatpush.xpose.msra.mxu0 0.0
    %197 = vmatpush.xpose.msra.mxu0 0.0
    %198 = vmatpush.xpose.msra.mxu0 0.0
    %199 = vmatpush.xpose.msra.mxu0 0.0
    %200 = vmatpush.xpose.msra.mxu0 0.0
    %201 = vmatpush.xpose.msra.mxu0 %v185
    %202 = vmatpush.xpose.msra.mxu0 %v182
    %203 = vmatmul.f32.gmra.mxu0 %v182
    %v204 = vpop.f32.mrf.mxu0
    %v205 = vadd.f32 0.0, %v204
    %206 = vmatmul.f32.gmra.mxu0 %v185
    %v207 = vpop.f32.mrf.mxu0
    %v208 = vadd.f32 0.0, %v207
    %209 = vdwg.mxu0
    %v211 = vsel %vm124, %v179, 0
    %v214 = vsel %vm124, %v180, 0
    %216 = vmatpush.xpose.msra.mxu0 0.0
    %217 = vmatpush.xpose.msra.mxu0 0.0
    %218 = vmatpush.xpose.msra.mxu0 0.0
    %219 = vmatpush.xpose.msra.mxu0 0.0
    %220 = vmatpush.xpose.msra.mxu0 0.0
    %221 = vmatpush.xpose.msra.mxu0 0.0
    %222 = vmatpush.xpose.msra.mxu0 0.0
    %223 = vmatpush.xpose.msra.mxu0 0.0
    %224 = vmatpush.xpose.msra.mxu0 0.0
    %225 = vmatpush.xpose.msra.mxu0 0.0
    %226 = vmatpush.xpose.msra.mxu0 0.0
    %227 = vmatpush.xpose.msra.mxu0 0.0
    %228 = vmatpush.xpose.msra.mxu0 0.0
    %229 = vmatpush.xpose.msra.mxu0 0.0
    %230 = vmatpush.xpose.msra.mxu0 %v214
    %231 = vmatpush.xpose.msra.mxu0 %v211
    %232 = vmatmul.f32.gmra.mxu0 %v211
    %v233 = vpop.f32.mrf.mxu0
    %v234 = vadd.f32 0.0, %v233
    %235 = vmatmul.f32.gmra.mxu0 %v214
    %v236 = vpop.f32.mrf.mxu0
    %v237 = vadd.f32 0.0, %v236
    %238 = vdwg.mxu0
    %v239 = vmul.f32 %v205, %v118
    %v240 = vmul.f32 %v208, %v119
    %v241 = vmul.f32 %v234, %v118
    %v242 = vmul.f32 %v237, %v119
    %v245 = vperm.slane %v65, 0
    %v246 = vperm.slane %v66, 0
    %v249 = vmul.f32 %v78, %v245
    %v250 = vmul.f32 %v79, %v245
    %v251 = vmul.f32 %v78, %v246
    %v252 = vmul.f32 %v79, %v246
    %v253 = vsel %vm80, %v249, 0.0
    %254 = vadd.xlane.f32.xlu0 %v253
    %v255 = vpop.xlane.xlu0 %254
    %v256 = vsel %vm80, %v250, 0.0
    %257 = vadd.xlane.f32.xlu0 %v256
    %v258 = vpop.xlane.xlu0 %257
    %v259 = vsel %vm80, %v251, 0.0
    %260 = vadd.xlane.f32.xlu0 %v259
    %v261 = vpop.xlane.xlu0 %260
    %v262 = vsel %vm80, %v252, 0.0
    %263 = vadd.xlane.f32.xlu0 %v262
    %v264 = vpop.xlane.xlu0 %263
    %v265 = vmul.f32 %v255, 0.5
    %v266 = vmul.f32 %v258, 0.5
    %v267 = vmul.f32 %v261, 0.5
    %v268 = vmul.f32 %v264, 0.5
    %v269 = vtanh.pop %v265
    %v270 = vtanh.pop %v266
    %v271 = vtanh.pop %v267
    %v272 = vtanh.pop %v268
    %v273 = vmul.f32 %v239, %v269
    %v274 = vmul.f32 %v240, %v270
    %v275 = vmul.f32 %v241, %v271
    %v276 = vmul.f32 %v242, %v272
    %v277 = vsel %vm80, %v273, 0.0
    %v278 = vsel %vm80, %v274, 0.0
    %v279 = vadd.f32 %v277, %v278
    %v280 = vrot.slane %v279, 4
    %v281 = vadd.f32 %v279, %v280
    %v282 = vrot.slane %v281, 2
    %v283 = vadd.f32 %v281, %v282
    %v284 = vrot.slane %v283, 1
    %v285 = vadd.f32 %v283, %v284
    %v286 = vsel %vm80, %v275, 0.0
    %v287 = vsel %vm80, %v276, 0.0
    %v288 = vadd.f32 %v286, %v287
    %v289 = vrot.slane %v288, 4
    %v290 = vadd.f32 %v288, %v289
    %v291 = vrot.slane %v290, 2
    %v292 = vadd.f32 %v290, %v291
    %v293 = vrot.slane %v292, 1
    %v294 = vadd.f32 %v292, %v293
    %v295 = vadd.f32 %v65, %v285
    %v296 = vadd.f32 %v66, %v294
    %v297 = vmul.f32 %v295, 0.5
    %v298 = vmul.f32 %v296, 0.5
    %v299 = vtanh.pop %v297
    %v300 = vtanh.pop %v298
    %v303 = vperm.slane %v299, 0
    %v304 = vperm.slane %v300, 0
    %v307 = vmul.f32 %v239, %v303
    %v308 = vmul.f32 %v240, %v303
    %v309 = vmul.f32 %v241, %v304
    %v310 = vmul.f32 %v242, %v304
    %v311 = vsel %vm80, %v307, 0.0
    %312 = vadd.xlane.f32.xlu0 %v311
    %v313 = vpop.xlane.xlu0 %312
    %v314 = vsel %vm80, %v308, 0.0
    %315 = vadd.xlane.f32.xlu0 %v314
    %v316 = vpop.xlane.xlu0 %315
    %v317 = vsel %vm80, %v309, 0.0
    %318 = vadd.xlane.f32.xlu0 %v317
    %v319 = vpop.xlane.xlu0 %318
    %v320 = vsel %vm80, %v310, 0.0
    %321 = vadd.xlane.f32.xlu0 %v320
    %v322 = vpop.xlane.xlu0 %321
    %v323 = vadd.f32 %v255, %v313
    %v324 = vadd.f32 %v258, %v316
    %v325 = vadd.f32 %v261, %v319
    %v326 = vadd.f32 %v264, %v322
    %v327 = vmul.f32 %v323, 0.5
    %v328 = vmul.f32 %v324, 0.5
    %v329 = vmul.f32 %v325, 0.5
    %v330 = vmul.f32 %v326, 0.5
    %v331 = vtanh.pop %v327
    %v332 = vtanh.pop %v328
    %v333 = vtanh.pop %v329
    %v334 = vtanh.pop %v330
    %v335 = vmul.f32 %v239, %v331
    %v336 = vmul.f32 %v240, %v332
    %v337 = vmul.f32 %v241, %v333
    %v338 = vmul.f32 %v242, %v334
    %v339 = vsel %vm80, %v335, 0.0
    %v340 = vsel %vm80, %v336, 0.0
    %v341 = vadd.f32 %v339, %v340
    %v342 = vrot.slane %v341, 4
    %v343 = vadd.f32 %v341, %v342
    %v344 = vrot.slane %v343, 2
    %v345 = vadd.f32 %v343, %v344
    %v346 = vrot.slane %v345, 1
    %v347 = vadd.f32 %v345, %v346
    %v348 = vsel %vm80, %v337, 0.0
    %v349 = vsel %vm80, %v338, 0.0
    %v350 = vadd.f32 %v348, %v349
    %v351 = vrot.slane %v350, 4
    %v352 = vadd.f32 %v350, %v351
    %v353 = vrot.slane %v352, 2
    %v354 = vadd.f32 %v352, %v353
    %v355 = vrot.slane %v354, 1
    %v356 = vadd.f32 %v354, %v355
    %v357 = vadd.f32 %v65, %v347
    %v358 = vadd.f32 %v66, %v356
    %v359 = vmul.f32 %v357, 0.5
    %v360 = vmul.f32 %v358, 0.5
    %v361 = vtanh.pop %v359
    %v362 = vtanh.pop %v360
    %v365 = vperm.slane %v361, 0
    %v366 = vperm.slane %v362, 0
    %v369 = vmul.f32 %v239, %v365
    %v370 = vmul.f32 %v240, %v365
    %v371 = vmul.f32 %v241, %v366
    %v372 = vmul.f32 %v242, %v366
    %v373 = vsel %vm80, %v369, 0.0
    %374 = vadd.xlane.f32.xlu0 %v373
    %v375 = vpop.xlane.xlu0 %374
    %v376 = vsel %vm80, %v370, 0.0
    %377 = vadd.xlane.f32.xlu0 %v376
    %v378 = vpop.xlane.xlu0 %377
    %v379 = vsel %vm80, %v371, 0.0
    %380 = vadd.xlane.f32.xlu0 %v379
    %v381 = vpop.xlane.xlu0 %380
    %v382 = vsel %vm80, %v372, 0.0
    %383 = vadd.xlane.f32.xlu0 %v382
    %v384 = vpop.xlane.xlu0 %383
    %v385 = vadd.f32 %v255, %v375
    %v386 = vadd.f32 %v258, %v378
    %v387 = vadd.f32 %v261, %v381
    %v388 = vadd.f32 %v264, %v384
    %v389 = vmul.f32 %v385, 0.5
    %v390 = vmul.f32 %v386, 0.5
    %v391 = vmul.f32 %v387, 0.5
    %v392 = vmul.f32 %v388, 0.5
    %v393 = vtanh.pop %v389
    %v394 = vtanh.pop %v390
    %v395 = vtanh.pop %v391
    %v396 = vtanh.pop %v392
    %v397 = vmul.f32 %v239, %v393
    %v398 = vmul.f32 %v240, %v394
    %v399 = vmul.f32 %v241, %v395
    %v400 = vmul.f32 %v242, %v396
    %v401 = vsel %vm80, %v397, 0.0
    %v402 = vsel %vm80, %v398, 0.0
    %v403 = vadd.f32 %v401, %v402
    %v404 = vrot.slane %v403, 4
    %v405 = vadd.f32 %v403, %v404
    %v406 = vrot.slane %v405, 2
    %v407 = vadd.f32 %v405, %v406
    %v408 = vrot.slane %v407, 1
    %v409 = vadd.f32 %v407, %v408
    %v410 = vsel %vm80, %v399, 0.0
    %v411 = vsel %vm80, %v400, 0.0
    %v412 = vadd.f32 %v410, %v411
    %v413 = vrot.slane %v412, 4
    %v414 = vadd.f32 %v412, %v413
    %v415 = vrot.slane %v414, 2
    %v416 = vadd.f32 %v414, %v415
    %v417 = vrot.slane %v416, 1
    %v418 = vadd.f32 %v416, %v417
    %v419 = vadd.f32 %v65, %v409
    %v420 = vadd.f32 %v66, %v418
    %v421 = vmul.f32 %v419, 0.5
    %v422 = vmul.f32 %v420, 0.5
    %v423 = vtanh.pop %v421
    %v424 = vtanh.pop %v422
    %v427 = vperm.slane %v423, 0
    %v428 = vperm.slane %v424, 0
    %v431 = vmul.f32 %v239, %v427
    %v432 = vmul.f32 %v240, %v427
    %v433 = vmul.f32 %v241, %v428
    %v434 = vmul.f32 %v242, %v428
    %v435 = vsel %vm80, %v431, 0.0
    %436 = vadd.xlane.f32.xlu0 %v435
    %v437 = vpop.xlane.xlu0 %436
    %v438 = vsel %vm80, %v432, 0.0
    %439 = vadd.xlane.f32.xlu0 %v438
    %v440 = vpop.xlane.xlu0 %439
    %v441 = vsel %vm80, %v433, 0.0
    %442 = vadd.xlane.f32.xlu0 %v441
    %v443 = vpop.xlane.xlu0 %442
    %v444 = vsel %vm80, %v434, 0.0
    %445 = vadd.xlane.f32.xlu0 %v444
    %v446 = vpop.xlane.xlu0 %445
    %v447 = vadd.f32 %v255, %v437
    %v448 = vadd.f32 %v258, %v440
    %v449 = vadd.f32 %v261, %v443
    %v450 = vadd.f32 %v264, %v446
    %v451 = vmul.f32 %v447, 0.5
    %v452 = vmul.f32 %v448, 0.5
    %v453 = vmul.f32 %v449, 0.5
    %v454 = vmul.f32 %v450, 0.5
    %v455 = vtanh.pop %v451
    %v456 = vtanh.pop %v452
    %v457 = vtanh.pop %v453
    %v458 = vtanh.pop %v454
    %v459 = vmul.f32 %v239, %v455
    %v460 = vmul.f32 %v240, %v456
    %v461 = vmul.f32 %v241, %v457
    %v462 = vmul.f32 %v242, %v458
    %v463 = vsel %vm80, %v459, 0.0
    %v464 = vsel %vm80, %v460, 0.0
    %v465 = vadd.f32 %v463, %v464
    %v466 = vrot.slane %v465, 4
    %v467 = vadd.f32 %v465, %v466
    %v468 = vrot.slane %v467, 2
    %v469 = vadd.f32 %v467, %v468
    %v470 = vrot.slane %v469, 1
    %v471 = vadd.f32 %v469, %v470
    %v472 = vsel %vm80, %v461, 0.0
    %v473 = vsel %vm80, %v462, 0.0
    %v474 = vadd.f32 %v472, %v473
    %v475 = vrot.slane %v474, 4
    %v476 = vadd.f32 %v474, %v475
    %v477 = vrot.slane %v476, 2
    %v478 = vadd.f32 %v476, %v477
    %v479 = vrot.slane %v478, 1
    %v480 = vadd.f32 %v478, %v479
    %v481 = vadd.f32 %v65, %v471
    %v482 = vadd.f32 %v66, %v480
    %v483 = vmul.f32 %v481, 0.5
    %v484 = vmul.f32 %v482, 0.5
    %v485 = vtanh.pop %v483
    %v486 = vtanh.pop %v484
    %v489 = vperm.slane %v485, 0
    %v490 = vperm.slane %v486, 0
    %v493 = vmul.f32 %v239, %v489
    %v494 = vmul.f32 %v240, %v489
    %v495 = vmul.f32 %v241, %v490
    %v496 = vmul.f32 %v242, %v490
    %v497 = vsel %vm80, %v493, 0.0
    %498 = vadd.xlane.f32.xlu0 %v497
    %v499 = vpop.xlane.xlu0 %498
    %v500 = vsel %vm80, %v494, 0.0
    %501 = vadd.xlane.f32.xlu0 %v500
    %v502 = vpop.xlane.xlu0 %501
    %v503 = vsel %vm80, %v495, 0.0
    %504 = vadd.xlane.f32.xlu0 %v503
    %v505 = vpop.xlane.xlu0 %504
    %v506 = vsel %vm80, %v496, 0.0
    %507 = vadd.xlane.f32.xlu0 %v506
    %v508 = vpop.xlane.xlu0 %507
    %v509 = vadd.f32 %v255, %v499
    %v510 = vadd.f32 %v258, %v502
    %v511 = vadd.f32 %v261, %v505
    %v512 = vadd.f32 %v264, %v508
    %v513 = vmul.f32 %v509, 0.5
    %v514 = vmul.f32 %v510, 0.5
    %v515 = vmul.f32 %v511, 0.5
    %v516 = vmul.f32 %v512, 0.5
    %v517 = vtanh.pop %v513
    %v518 = vtanh.pop %v514
    %v519 = vtanh.pop %v515
    %v520 = vtanh.pop %v516
    %v521 = vmul.f32 %v239, %v517
    %v522 = vmul.f32 %v240, %v518
    %v523 = vmul.f32 %v241, %v519
    %v524 = vmul.f32 %v242, %v520
    %v525 = vsel %vm80, %v521, 0.0
    %v526 = vsel %vm80, %v522, 0.0
    %v527 = vadd.f32 %v525, %v526
    %v528 = vrot.slane %v527, 4
    %v529 = vadd.f32 %v527, %v528
    %v530 = vrot.slane %v529, 2
    %v531 = vadd.f32 %v529, %v530
    %v532 = vrot.slane %v531, 1
    %v533 = vadd.f32 %v531, %v532
    %v534 = vsel %vm80, %v523, 0.0
    %v535 = vsel %vm80, %v524, 0.0
    %v536 = vadd.f32 %v534, %v535
    %v537 = vrot.slane %v536, 4
    %v538 = vadd.f32 %v536, %v537
    %v539 = vrot.slane %v538, 2
    %v540 = vadd.f32 %v538, %v539
    %v541 = vrot.slane %v540, 1
    %v542 = vadd.f32 %v540, %v541
    %v543 = vadd.f32 %v65, %v533
    %v544 = vadd.f32 %v66, %v542
    %v545 = vmul.f32 %v543, 0.5
    %v546 = vmul.f32 %v544, 0.5
    %v547 = vtanh.pop %v545
    %v548 = vtanh.pop %v546
    %v551 = vperm.slane %v547, 0
    %v552 = vperm.slane %v548, 0
    %v555 = vmul.f32 %v239, %v551
    %v556 = vmul.f32 %v240, %v551
    %v557 = vmul.f32 %v241, %v552
    %v558 = vmul.f32 %v242, %v552
    %v559 = vsel %vm80, %v555, 0.0
    %560 = vadd.xlane.f32.xlu0 %v559
    %v561 = vpop.xlane.xlu0 %560
    %v562 = vsel %vm80, %v556, 0.0
    %563 = vadd.xlane.f32.xlu0 %v562
    %v564 = vpop.xlane.xlu0 %563
    %v565 = vsel %vm80, %v557, 0.0
    %566 = vadd.xlane.f32.xlu0 %v565
    %v567 = vpop.xlane.xlu0 %566
    %v568 = vsel %vm80, %v558, 0.0
    %569 = vadd.xlane.f32.xlu0 %v568
    %v570 = vpop.xlane.xlu0 %569
    %v571 = vadd.f32 %v255, %v561
    %v572 = vadd.f32 %v258, %v564
    %v573 = vadd.f32 %v261, %v567
    %v574 = vadd.f32 %v264, %v570
    %vm575 = vcmask 7168
    %576 = vst.msk [vmem:[%s3] sm:$0xff] %vm575, %v571
    %577 = vst.msk [vmem:[%s3 + $0x8] sm:$0xff] %vm575, %v572
    %578 = vst.msk [vmem:[%s3 + $0x10] sm:$0xff] %vm575, %v573
    %579 = vst.msk [vmem:[%s3 + $0x18] sm:$0xff] %vm575, %v574
    // Predicated region
    $region26: #{tpu_custom_call.1} parent=1 // pred_check
      _
    $region27: #{tpu_custom_call.1} parent=1 // pred_check_branch
      %581 = sbr.rel (0) target = $region29
    $region28: #{tpu_custom_call.1} parent=1 // pred_region
      _
    $region29: #{tpu_custom_call.1} parent=1 // pred_fallthru
      _
    // Predicated region
    $region30: #{tpu_custom_call.1} parent=1 // pred_check
      _
    $region31: #{tpu_custom_call.1} parent=1 // pred_check_branch
      %583 = sbr.rel (0) target = $region33
    $region32: #{tpu_custom_call.1} parent=1 // pred_region
      _
    $region33: #{tpu_custom_call.1} parent=1 // pred_fallthru
      _
    %584 = vsyncpa [#allocation3], 1
    %585 = vsyncpa [#allocation5], 1

</llo_original>
